<compile_context>
chip_gen: v7x
topology: tpu7x:2x2x1
jax: 0.10.0
libtpu: 0.0.40
codegen_flags: <defaults>
</compile_context>

<pallas_src>
import functools

import jax
import jax.numpy as jnp
from jax.experimental import pallas as pl
from jax.experimental.pallas import tpu as pltpu


def _round_up(x, m):
    return ((x + m - 1) // m) * m


def _vmem_capacity_bytes():
    """Per-core VMEM capacity; falls back to 64 MiB (v7x, the smallest)."""
    try:
        info = pltpu.get_tpu_info()
        cap = getattr(info, "vmem_capacity_bytes", None)
        if cap:
            return int(cap)
    except Exception:
        pass
    return 64 * (1 << 20)


def _choose_tile_rows(rows, hidden, vmem_cap):
    """8-aligned row tile: big enough to amortize per-grid-step overhead,
    small enough for ~6 live f32 row-tiles in 75% of VMEM, and split so the
    grid has >= 2 steps (megacore sharding on v7x) when rows allow it."""
    bytes_per_row = hidden * 4
    budget = int(vmem_cap * 0.75)
    max_by_vmem = max(8, (budget // (6 * bytes_per_row)) // 8 * 8)
    cap = 2048  # ~2 MiB output block at H=256; DMA-dominated already on v5e.
    if rows > 16:
        # Ensure at least two grid steps so dimension_semantics=("parallel",)
        # can shard across both TensorCores on v7x.
        cap = min(cap, _round_up(pl.cdiv(rows, 2), 8))
    tile = min(cap, _round_up(rows, 8), max_by_vmem)
    return max(8, tile)


def _fused_embed_layernorm_kernel(idx_ref, tab_ref, gb_ref, o_ref, *, eps):
    # idx_ref: (t, 2) int32  -> col 0: word id, col 1: vocab + position id
    # tab_ref: (K_pad, H)    -> [word_table; pos_table; zero padding]
    # gb_ref : (2, H)        -> row 0: gamma, row 1: beta
    # o_ref  : (t, H)
    t = idx_ref.shape[0]
    kdim = tab_ref.shape[0]
    hidden = o_ref.shape[-1]

    idx = idx_ref[...]                                           # (t, 2)
    word_id = idx[:, 0:1]                                        # (t, 1)
    pos_id = idx[:, 1:2]                                         # (t, 1)

    # Single one-hot with two 1s per row (columns are disjoint by construction)
    # -> one MXU matmul computes word_emb + pos_emb. Zero-padded table rows are
    # never selected.
    iota = jax.lax.broadcasted_iota(jnp.int32, (t, kdim), 1)
    onehot = jnp.logical_or(word_id == iota, pos_id == iota).astype(jnp.float32)
    x = jnp.dot(onehot, tab_ref[...].astype(jnp.float32),
                preferred_element_type=jnp.float32)              # (t, H)

    # Single-pass TF-style LayerNorm stats over the lane axis.
    inv_h = jnp.float32(1.0 / hidden)
    mean = jnp.sum(x, axis=-1, keepdims=True) * inv_h
    ex2 = jnp.sum(x * x, axis=-1, keepdims=True) * inv_h
    var = jnp.maximum(ex2 - mean * mean, 0.0)                    # guard cancellation
    inv = jax.lax.rsqrt(var + eps)

    gamma = gb_ref[0:1, :].astype(jnp.float32)
    beta = gb_ref[1:2, :].astype(jnp.float32)
    o_ref[...] = ((x - mean) * inv * gamma + beta).astype(o_ref.dtype)


def trans_embeddings(input_ids, word_table, pos_table, ln_weight, ln_bias,
                     eps=1e-12):
    """Fused forward of TransEmbeddings (dropout applied as identity)."""
    batch, seq = input_ids.shape
    vocab, hidden = word_table.shape
    n_pos = pos_table.shape[0]
    rows = batch * seq

    # Pack word ids and (vocab-offset) position ids into one (rows, 2) array
    # -> one small DMA per grid step instead of two.
    ids = input_ids.reshape(rows).astype(jnp.int32)
    pos = jnp.tile(jnp.arange(seq, dtype=jnp.int32), batch) + jnp.int32(vocab)
    idx2 = jnp.stack([ids, pos], axis=1)                         # (rows, 2)

    # Fuse both embedding tables into one (K_pad, H) table (rows padded to a
    # multiple of 8 with zeros; padded rows are never selected by the one-hot).
    k = vocab + n_pos
    k_pad = _round_up(k, 8)
    table = jnp.concatenate([word_table, pos_table], axis=0)
    if k_pad != k:
        table = jnp.concatenate(
            [table, jnp.zeros((k_pad - k, hidden), table.dtype)], axis=0)

    # Pack gamma/beta into one (2, H) array -> one constant-block DMA.
    gb = jnp.stack([ln_weight, ln_bias], axis=0).astype(word_table.dtype)

    vmem_cap = _vmem_capacity_bytes()
    tile_rows = _choose_tile_rows(rows, hidden, vmem_cap)
    grid = (pl.cdiv(rows, tile_rows),)

    # Honest VMEM request: 2 double-buffered output blocks + ~6 in-body f32
    # row-tile temporaries, double-buffered ids / table / gamma-beta, plus
    # headroom for compiler-internal scratch. No artificial 32/64 MiB floor/cap.
    row_tile_bytes = tile_rows * hidden * 4
    vmem_est = (8 * row_tile_bytes                  # out double-buffer + temps
                + 2 * tile_rows * k_pad * 4         # one-hot temporary + slack
                + 2 * tile_rows * 2 * 4             # packed ids (double-buffered)
                + 2 * k_pad * hidden * 4            # fused table (double-buffered)
                + 2 * 2 * hidden * 4                # gamma/beta (double-buffered)
                + 4 * (1 << 20))                    # headroom
    vmem_limit = int(min(vmem_cap, vmem_est))

    kernel = functools.partial(_fused_embed_layernorm_kernel, eps=eps)

    # Note: the table / gamma-beta blocks have constant block indices, so Pallas
    # does not re-DMA them each step; pl.Buffered(1) could reclaim their second
    # VMEM buffer (~100 KiB) but is skipped to keep the spec maximally portable.
    out2 = pl.pallas_call(
        kernel,
        out_shape=jax.ShapeDtypeStruct((rows, hidden), word_table.dtype),
        grid_spec=pl.GridSpec(
            grid=grid,
            in_specs=[
                pl.BlockSpec((tile_rows, 2), lambda i: (i, 0)),    # packed ids
                pl.BlockSpec((k_pad, hidden), lambda i: (0, 0)),   # fused table
                pl.BlockSpec((2, hidden), lambda i: (0, 0)),       # gamma/beta
            ],
            out_specs=pl.BlockSpec((tile_rows, hidden), lambda i: (i, 0)),
        ),
        compiler_params=pltpu.CompilerParams(
            dimension_semantics=("parallel",),
            vmem_limit_bytes=vmem_limit,
        ),
    )(idx2, table, gb)

    # Ragged last block: Pallas clamps/pads the block; padded rows compute
    # garbage-but-finite values and are masked on writeback (per-row LN -> no
    # cross-row leakage).
    # TODO(synk): training-mode dropout (p=0.2) is stochastic; applied as
    # identity here (inference). Could be fused via pltpu.prng_seed +
    # pltpu.stateful_bernoulli if training parity is needed.
    return out2.reshape(batch, seq, hidden)


def _reference(input_ids, word_table, pos_table, gamma, beta, eps=1e-12):
    batch, seq = input_ids.shape
    we = word_table[input_ids]                              # (B, S, H)
    pe = pos_table[jnp.arange(seq)][None, :, :]             # (1, S, H)
    x = we + pe
    u = jnp.mean(x, axis=-1, keepdims=True)
    s = jnp.mean((x - u) ** 2, axis=-1, keepdims=True)
    xn = (x - u) / jnp.sqrt(s + eps)
    return gamma * xn + beta


if __name__ == "__main__":
    key = jax.random.PRNGKey(0)
    k_ids, k_w, k_p, k_ids2 = jax.random.split(key, 4)

    # Module defaults: emb_size=256, vocab_size=16, seq_len=23.
    vocab, hidden, seq = 16, 256, 23
    word_table = jax.random.normal(k_w, (vocab, hidden), dtype=jnp.float32)
    pos_table = jax.random.normal(k_p, (seq, hidden), dtype=jnp.float32)
    ln_weight = jnp.ones((hidden,), dtype=jnp.float32)   # nn.Parameter(torch.ones)
    ln_bias = jnp.zeros((hidden,), dtype=jnp.float32)    # nn.Parameter(torch.zeros)

    # Small default shape + a larger batch to exercise the multi-step grid and
    # the ragged last block.
    for kk, batch in ((k_ids, 2), (k_ids2, 16)):
        input_ids = jax.random.randint(kk, (batch, seq), 0, vocab, dtype=jnp.int32)
        out = trans_embeddings(input_ids, word_table, pos_table, ln_weight, ln_bias)
        out = jax.block_until_ready(out)
        ref = _reference(input_ids, word_table, pos_table, ln_weight, ln_bias)
        assert out.shape == (batch, seq, hidden)
        assert jnp.allclose(out, ref, atol=1e-5, rtol=1e-5), "mismatch vs reference"

    print("KERNEL_OK")
</pallas_src>

<mosaic_0001>
module attributes {stable_mosaic.version = 11 : i64} {
  func.func @_fused_embed_layernorm_kernel(%arg0: i32, %arg1: memref<24x2xi32, #tpu.memory_space<vmem>>, %arg2: memref<40x256xf32, #tpu.memory_space<vmem>>, %arg3: memref<2x256xf32, #tpu.memory_space<vmem>>, %arg4: memref<24x256xf32, #tpu.memory_space<vmem>>) attributes {dimension_semantics = [#tpu.dimension_semantics<parallel>], iteration_bounds = array<i64: 2>, scalar_prefetch = 0 : i64, scratch_operands = 0 : i64, tpu.core_type = #tpu.core_type<tc>, window_params = [{transform_indices = @transform_0, window_bounds = array<i64: 24, 2>}, {pipeline_mode = #tpu.pipeline_mode<synchronous>, transform_indices = @transform_1, window_bounds = array<i64: 40, 256>}, {pipeline_mode = #tpu.pipeline_mode<synchronous>, transform_indices = @transform_2, window_bounds = array<i64: 2, 256>}, {transform_indices = @transform_3, window_bounds = array<i64: 24, 256>}]} {
    %c0 = arith.constant 0 : index
    %c0_0 = arith.constant 0 : index
    %0 = vector.load %arg1[%c0, %c0_0] : memref<24x2xi32, #tpu.memory_space<vmem>>, vector<24x2xi32>
    %1 = vector.extract_strided_slice %0 {offsets = [0, 0], sizes = [24, 1], strides = [1, 1]} : vector<24x2xi32> to vector<24x1xi32>
    %2 = vector.extract_strided_slice %0 {offsets = [0, 1], sizes = [24, 1], strides = [1, 1]} : vector<24x2xi32> to vector<24x1xi32>
    %3 = tpu.iota {dimensions = array<i32: 1>} : vector<24x40xi32>
    %4 = vector.broadcast %1 : vector<24x1xi32> to vector<24x40xi32>
    %5 = arith.cmpi eq, %4, %3 : vector<24x40xi32>
    %6 = vector.broadcast %2 : vector<24x1xi32> to vector<24x40xi32>
    %7 = arith.cmpi eq, %6, %3 : vector<24x40xi32>
    %8 = arith.ori %5, %7 : vector<24x40xi1>
    %9 = arith.extui %8 : vector<24x40xi1> to vector<24x40xi32>
    %10 = arith.sitofp %9 : vector<24x40xi32> to vector<24x40xf32>
    %c0_1 = arith.constant 0 : index
    %c0_2 = arith.constant 0 : index
    %11 = vector.load %arg2[%c0_1, %c0_2] : memref<40x256xf32, #tpu.memory_space<vmem>>, vector<40x256xf32>
    %cst = arith.constant dense<0.000000e+00> : vector<24x256xf32>
    %12 = tpu.matmul %10, %11, %cst {dimension_numbers = #tpu.dot_dimension_numbers<[1], [0], [0], [1], [0, 0, 1, 1], [], []>} : vector<24x40xf32>, vector<40x256xf32>, vector<24x256xf32> -> vector<24x256xf32>
    %cst_3 = arith.constant dense<0.000000e+00> : vector<24xf32>
    %13 = vector.multi_reduction <add>, %12, %cst_3 [1] : vector<24x256xf32> to vector<24xf32>
    %14 = vector.shape_cast %13 : vector<24xf32> to vector<24x1xf32>
    %cst_4 = arith.constant 3.906250e-03 : f32
    %15 = vector.broadcast %cst_4 : f32 to vector<24x1xf32>
    %16 = arith.mulf %14, %15 : vector<24x1xf32>
    %17 = arith.mulf %12, %12 : vector<24x256xf32>
    %cst_5 = arith.constant dense<0.000000e+00> : vector<24xf32>
    %18 = vector.multi_reduction <add>, %17, %cst_5 [1] : vector<24x256xf32> to vector<24xf32>
    %19 = vector.shape_cast %18 : vector<24xf32> to vector<24x1xf32>
    %cst_6 = arith.constant 3.906250e-03 : f32
    %20 = vector.broadcast %cst_6 : f32 to vector<24x1xf32>
    %21 = arith.mulf %19, %20 : vector<24x1xf32>
    %22 = arith.mulf %16, %16 : vector<24x1xf32>
    %23 = arith.subf %21, %22 : vector<24x1xf32>
    %cst_7 = arith.constant 0.000000e+00 : f32
    %24 = vector.broadcast %cst_7 : f32 to vector<24x1xf32>
    %25 = arith.maximumf %23, %24 : vector<24x1xf32>
    %cst_8 = arith.constant 9.99999996E-13 : f32
    %26 = vector.broadcast %cst_8 : f32 to vector<24x1xf32>
    %27 = arith.addf %25, %26 : vector<24x1xf32>
    %28 = math.rsqrt %27 : vector<24x1xf32>
    %c0_9 = arith.constant 0 : index
    %c0_10 = arith.constant 0 : index
    %29 = vector.load %arg3[%c0_9, %c0_10] : memref<2x256xf32, #tpu.memory_space<vmem>>, vector<1x256xf32>
    %c1 = arith.constant 1 : index
    %c0_11 = arith.constant 0 : index
    %30 = vector.load %arg3[%c1, %c0_11] : memref<2x256xf32, #tpu.memory_space<vmem>>, vector<1x256xf32>
    %31 = vector.broadcast %16 : vector<24x1xf32> to vector<24x256xf32>
    %32 = arith.subf %12, %31 : vector<24x256xf32>
    %33 = vector.broadcast %28 : vector<24x1xf32> to vector<24x256xf32>
    %34 = arith.mulf %32, %33 : vector<24x256xf32>
    %35 = vector.broadcast %29 : vector<1x256xf32> to vector<24x256xf32>
    %36 = arith.mulf %34, %35 : vector<24x256xf32>
    %37 = vector.broadcast %30 : vector<1x256xf32> to vector<24x256xf32>
    %38 = arith.addf %36, %37 : vector<24x256xf32>
    %c0_12 = arith.constant 0 : index
    %c0_13 = arith.constant 0 : index
    %39 = vector.load %arg4[%c0_12, %c0_13] : memref<24x256xf32, #tpu.memory_space<vmem>>, vector<24x256xf32>
    tpu.vector_store %arg4[%c0_12, %c0_13], %38 {strides = array<i32>} : memref<24x256xf32, #tpu.memory_space<vmem>>, vector<24x256xf32>,
    return
  }
  func.func @transform_0(%arg0: i32) -> (i32, i32) {
    %c0_i32 = arith.constant 0 : i32
    %c0_i32_0 = arith.constant 0 : i32
    return %arg0, %c0_i32 : i32, i32
  }
  func.func @transform_1(%arg0: i32) -> (i32, i32) {
    %c0_i32 = arith.constant 0 : i32
    %c0_i32_0 = arith.constant 0 : i32
    %c0_i32_1 = arith.constant 0 : i32
    return %c0_i32, %c0_i32_0 : i32, i32
  }
  func.func @transform_2(%arg0: i32) -> (i32, i32) {
    %c0_i32 = arith.constant 0 : i32
    %c0_i32_0 = arith.constant 0 : i32
    %c0_i32_1 = arith.constant 0 : i32
    return %c0_i32, %c0_i32_0 : i32, i32
  }
  func.func @transform_3(%arg0: i32) -> (i32, i32) {
    %c0_i32 = arith.constant 0 : i32
    %c0_i32_0 = arith.constant 0 : i32
    return %arg0, %c0_i32 : i32, i32
  }
}

</mosaic_0001>

<llo_original>
// kernel: tpu_custom_call.1
$region0: #{tpu_custom_call.1}
  #allocation0 [shape = 'u32[]', space=smem, size = 0x4, offset = 0x4, fixed_abs, tag = 'smem constant byte address 0x4 - core index']
  #allocation1 [shape = 'u32[144,128]{1,0:T(1,128)}', space=vmem, size = 0x12000, scoped, tag = 'internal scratch']
  %s0 = inlined_call_operand.vmem [shape: s32[46,2], index: 0, kind: input, shape index: {}]
  %s1 = inlined_call_operand.hbm [shape: f32[40,256], index: 1, kind: input, shape index: {}]
  %s2 = inlined_call_operand.vmem [shape: f32[2,256], index: 2, kind: input, shape index: {}]
  %s3 = inlined_call_operand.hbm [shape: f32[46,256], index: 3, kind: output, shape index: {}]
  %s4 = sld [smem:[#allocation0]]
  $region49: #{tpu_custom_call.1} parent=0
    _
  %s6 = ssub.s32 1, %s4
  %s7 = scalar_select 0, %s6, %s4
  $region1: #{tpu_custom_call.1} parent=0
    #allocation2 [shape = 'u8[40960]{0}', space=vmem, size = 0xa000, scoped, tag = 'input window, operand 1, single buffered']
    #allocation3 [shape = 's32[2]{0}', space=sflag, size = 0x8, scoped, tag = 'scoped memory for tpu_custom_call.1']
    #allocation4 [shape = 's32[2]{0}', space=sflag, size = 0x8, scoped, tag = 'scoped memory for tpu_custom_call.1']
    #allocation5 [shape = 'u8[49152]{0}', space=vmem, size = 0xc000, scoped, tag = 'output window, operand 0']
    %8 = vsyncpa [#allocation3], 0
    %9 = vsyncpa [#allocation4], 0
    %s10 = scalar_lea.sflag [#allocation4], 1
    %11 = vsyncpa %s10, 0
    loop: start=0, step=1, limit=4
    $region2: #{tpu_custom_call.1} parent=1 // loop_pre_header
      _
    $region3: #{tpu_custom_call.1} parent=1 // loop_header
      %s13 = sphi 0, %s17
      %p14 = scmp.ge.s32.totalorder %s13, 4
      %s23 = sphi 0, %s25
      %s26 = sphi 0, %s23
      %s27 = sphi 0, %s26
      %s43 = sphi 0, %s27
      %s47 = sphi 0, %s47
      %s49 = sphi 0, %s47
      %s50 = sphi 0, %s49
      %s64 = sphi 0, %s50
      %s68 = sphi 0, %s68
      %s70 = sphi 0, %s68
      %s71 = sphi 0, %s70
      %s85 = sphi 0, %s71
      %s91 = sphi 0, %s93
      %s94 = sphi 0, %s91
      %s95 = sphi 0, %s94
      %s111 = sphi 0, %s95
    $region4: #{tpu_custom_call.1} parent=1 // loop_header_branch
      %16 = sbr.rel (%p14) target = $region8
    $region5: #{tpu_custom_call.1} parent=1 // loop_body
      %s18 = ssub.s32 %s13, 1
      %s19 = ssub.s32 %s13, 2
      %s20 = sadd.s32 %s13, 1
      %s21 = ssub.s32 %s13, %s20
      %p22 = scmp.eq.s32.totalorder %s21, 0
      %s24 = sadd.s32 %s23, 1
      %s25 = scalar_select %p22, %s23, %s24
      %p28 = pneg %p22
      %p29 = scmp.eq.s32.totalorder %s13, 1
      %p30 = por %p28, %p29
      %p31 = scmp.ne.s32.totalorder %s23, %s26
      %p32 = scmp.eq.s32.totalorder %s13, 0
      %p33 = por %p31, %p32
      %p34 = scmp.ne.s32.totalorder %s23, %s26
      %p35 = scmp.eq.s32.totalorder %s18, 1
      %p36 = por %p34, %p35
      %p37 = scmp.ne.s32.totalorder %s26, %s27
      %p38 = scmp.eq.s32.totalorder %s18, 0
      %p39 = por %p37, %p38
      %p40 = scmp.ne.s32.totalorder %s26, %s27
      %p41 = scmp.eq.s32.totalorder %s19, 1
      %p42 = por %p40, %p41
      %p44 = scmp.ne.s32.totalorder %s27, %s43
      %p45 = scmp.eq.s32.totalorder %s19, 0
      %p46 = por %p44, %p45
      %s48 = sadd.s32 %s47, 1
      %p51 = scmp.eq.s32.totalorder %s13, 1
      %p52 = scmp.ne.s32.totalorder %s47, %s49
      %p53 = scmp.eq.s32.totalorder %s13, 0
      %p54 = por %p52, %p53
      %p55 = scmp.ne.s32.totalorder %s47, %s49
      %p56 = scmp.eq.s32.totalorder %s18, 1
      %p57 = por %p55, %p56
      %p58 = scmp.ne.s32.totalorder %s49, %s50
      %p59 = scmp.eq.s32.totalorder %s18, 0
      %p60 = por %p58, %p59
      %p61 = scmp.ne.s32.totalorder %s49, %s50
      %p62 = scmp.eq.s32.totalorder %s19, 1
      %p63 = por %p61, %p62
      %p65 = scmp.ne.s32.totalorder %s50, %s64
      %p66 = scmp.eq.s32.totalorder %s19, 0
      %p67 = por %p65, %p66
      %s69 = sadd.s32 %s68, 1
      %p72 = scmp.eq.s32.totalorder %s13, 1
      %p73 = scmp.ne.s32.totalorder %s68, %s70
      %p74 = scmp.eq.s32.totalorder %s13, 0
      %p75 = por %p73, %p74
      %p76 = scmp.ne.s32.totalorder %s68, %s70
      %p77 = scmp.eq.s32.totalorder %s18, 1
      %p78 = por %p76, %p77
      %p79 = scmp.ne.s32.totalorder %s70, %s71
      %p80 = scmp.eq.s32.totalorder %s18, 0
      %p81 = por %p79, %p80
      %p82 = scmp.ne.s32.totalorder %s70, %s71
      %p83 = scmp.eq.s32.totalorder %s19, 1
      %p84 = por %p82, %p83
      %p86 = scmp.ne.s32.totalorder %s71, %s85
      %p87 = scmp.eq.s32.totalorder %s19, 0
      %p88 = por %p86, %p87
      %s89 = ssub.s32 %s13, %s20
      %p90 = scmp.eq.s32.totalorder %s89, 0
      %s92 = sadd.s32 %s91, 1
      %s93 = scalar_select %p90, %s91, %s92
      %p96 = pneg %p90
      %p97 = scmp.eq.s32.totalorder %s13, 1
      %p98 = por %p96, %p97
      %p99 = scmp.ne.s32.totalorder %s91, %s94
      %p100 = scmp.eq.s32.totalorder %s13, 0
      %p101 = por %p99, %p100
      %p102 = scmp.ne.s32.totalorder %s91, %s94
      %p103 = scmp.eq.s32.totalorder %s18, 1
      %p104 = por %p102, %p103
      %p105 = scmp.ne.s32.totalorder %s94, %s95
      %p106 = scmp.eq.s32.totalorder %s18, 0
      %p107 = por %p105, %p106
      %p108 = scmp.ne.s32.totalorder %s94, %s95
      %p109 = scmp.eq.s32.totalorder %s19, 1
      %p110 = por %p108, %p109
      %p112 = scmp.ne.s32.totalorder %s95, %s111
      %p113 = scmp.eq.s32.totalorder %s19, 0
      %p114 = por %p112, %p113
      %p115 = scmp.le.s32.totalorder 1, %s13
      %p116 = scmp.lt.s32.totalorder %s13, 3
      %p117 = pnand %p115, %p116
      %p118 = pneg %p117
      // Predicated region
      $region9: #{tpu_custom_call.1} parent=5 // pred_check
        _
      $region10: #{tpu_custom_call.1} parent=5 // pred_check_branch
        %120 = sbr.rel (%p117) target = $region12
      $region11: #{tpu_custom_call.1} parent=5 // pred_region
        %s121 = ssub.s32 %s13, 1
        // Predicated region
        $region13: #{tpu_custom_call.1} parent=11 // pred_check
          %p122 = pneg %p60
        $region14: #{tpu_custom_call.1} parent=11 // pred_check_branch
          %124 = sbr.rel (%p122) target = $region16
        $region15: #{tpu_custom_call.1} parent=11 // pred_region
          %s126 = ssub.s32 1280, 1280
          %127 = vsyncadd [#allocation3], %s126
          %s128 = sshll.u32 [#allocation2], 4
          %s129 = int_to_ptr.vmem [resolvable:$true] %s128
          %134 = dma.hbm_to_vmem [thread:$0]  %s1, 1280, %s129, [#allocation3], 256, 256, 16
        $region16: #{tpu_custom_call.1} parent=11 // pred_fallthru
          _
        // Predicated region
        $region17: #{tpu_custom_call.1} parent=11 // pred_check
          %p135 = pneg %p81
        $region18: #{tpu_custom_call.1} parent=11 // pred_check_branch
          %137 = sbr.rel (%p135) target = $region20
        $region19: #{tpu_custom_call.1} parent=11 // pred_region
          _
        $region20: #{tpu_custom_call.1} parent=11 // pred_fallthru
          _
      $region12: #{tpu_custom_call.1} parent=5 // pred_fallthru
        _
      %p138 = scmp.lt.s32.totalorder %s13, 2
      // Predicated region
      $region21: #{tpu_custom_call.1} parent=5 // pred_check
        %p139 = pneg %p138
      $region22: #{tpu_custom_call.1} parent=5 // pred_check_branch
        %141 = sbr.rel (%p139) target = $region24
      $region23: #{tpu_custom_call.1} parent=5 // pred_region
        // Predicated region
        $region25: #{tpu_custom_call.1} parent=23 // pred_check
          %p142 = pneg %p33
        $region26: #{tpu_custom_call.1} parent=23 // pred_check_branch
          %144 = sbr.rel (%p142) target = $region28
        $region27: #{tpu_custom_call.1} parent=23 // pred_region
          %s145 = smul.u32 3, %s13
          %p146 = scmp.lt.s32.totalorder %s145, 5
          %s147 = scalar_select %p146, %s145, 5
          %s148 = smul.addr %s147, 8
          %s149 = scalar_lea.vmem %s0, %s148
          %s150 = smul.u32 3, %s13
        $region28: #{tpu_custom_call.1} parent=23 // pred_fallthru
          _
      $region24: #{tpu_custom_call.1} parent=5 // pred_fallthru
        _
      %p151 = scmp.le.s32.totalorder 1, %s13
      %p152 = scmp.lt.s32.totalorder %s13, 3
      %p153 = pnand %p151, %p152
      %p154 = pneg %p153
      // Predicated region
      $region29: #{tpu_custom_call.1} parent=5 // pred_check
        _
      $region30: #{tpu_custom_call.1} parent=5 // pred_check_branch
        %156 = sbr.rel (%p153) target = $region32
      $region31: #{tpu_custom_call.1} parent=5 // pred_region
        %s157 = ssub.s32 %s13, 1
        // Predicated region
        $region33: #{tpu_custom_call.1} parent=31 // pred_check
          %p158 = pneg %p60
        $region34: #{tpu_custom_call.1} parent=31 // pred_check_branch
          %160 = sbr.rel (%p158) target = $region36
        $region35: #{tpu_custom_call.1} parent=31 // pred_region
          %161 = dma.done [#allocation3], 1280
        $region36: #{tpu_custom_call.1} parent=31 // pred_fallthru
          _
        %s162 = smul.u32 3, %s18
        %p163 = scmp.lt.s32.totalorder %s162, 5
        %s164 = scalar_select %p163, %s162, 5
        %s165 = smul.addr %s164, 8
        %s166 = scalar_lea.vmem %s0, %s165
        %p167 = pneg %p39
        %p168 = pneg %p36
        %p169 = pneg %p60
        %p170 = pneg %p57
        %p171 = pneg %p81
        %p172 = pneg %p78
        %p173 = pneg %p107
        %p174 = pneg %p104
        %s175 = sand.u32 %s94, 1
        %s176 = scalar_lea.sflag [#allocation4], %s175
        %s177 = sand.u32 %s94, 1
        %s178 = smul.addr %s177, 48
        %s179 = scalar_lea.vmem [#allocation5], %s178
        %s180 = smul.u32 3, %s18
        %p181 = scmp.lt.s32.totalorder %s180, 5
        %s182 = scalar_select %p181, %s180, 5
        %s183 = smul.addr %s182, 8
        %s184 = scalar_lea.vmem %s0, %s183
        %s185 = smul.u32 3, %s18
        %s186 = smul.u32 3, %s18
        %v187 = vld [vmem:[%s184] sm:$0xff]
        %v188 = vld [vmem:[%s184 + $0x8] sm:$0xff]
        %v189 = vld [vmem:[%s184 + $0x10] sm:$0xff]
        %v190 = vlaneseq
        %v191 = vand.u32 %v190, 127
        %192 = vset.pattern.permute.xlu0 0
        %193 = vperm.xlu0 %192, %v187
        %v194 = vpop.permute.xlu0 %193
        %195 = vset.pattern.permute.xlu0 0
        %196 = vperm.xlu0 %195, %v188
        %v197 = vpop.permute.xlu0 %196
        %198 = vset.pattern.permute.xlu0 0
        %199 = vperm.xlu0 %198, %v189
        %v200 = vpop.permute.xlu0 %199
        %vm201 = vcmp.eq.s32.totalorder %v194, %v191
        %vm202 = vcmp.eq.s32.totalorder %v197, %v191
        %vm203 = vcmp.eq.s32.totalorder %v200, %v191
        %204 = vset.pattern.permute.xlu0 1
        %205 = vperm.xlu0 %204, %v187
        %v206 = vpop.permute.xlu0 %205
        %207 = vset.pattern.permute.xlu0 1
        %208 = vperm.xlu0 %207, %v188
        %v209 = vpop.permute.xlu0 %208
        %210 = vset.pattern.permute.xlu0 1
        %211 = vperm.xlu0 %210, %v189
        %v212 = vpop.permute.xlu0 %211
        %vm213 = vcmp.eq.s32.totalorder %v206, %v191
        %vm214 = vcmp.eq.s32.totalorder %v209, %v191
        %vm215 = vcmp.eq.s32.totalorder %v212, %v191
        %vm216 = vmor %vm201, %vm213
        %vm217 = vmor %vm202, %vm214
        %vm218 = vmor %vm203, %vm215
        %v219 = vsel %vm216, 1, 0
        %v220 = vsel %vm217, 1, 0
        %v221 = vsel %vm218, 1, 0
        %v222 = vcvt.s32.f32 %v219
        %v223 = vcvt.s32.f32 %v220
        %v224 = vcvt.s32.f32 %v221
        %v225 = vld [vmem:[#allocation2] sm:$0xff]
        %v226 = vld [vmem:[#allocation2 + $0x8] sm:$0xff]
        %v227 = vld [vmem:[#allocation2 + $0x10] sm:$0xff]
        %v228 = vld [vmem:[#allocation2 + $0x18] sm:$0xff]
        %v229 = vld [vmem:[#allocation2 + $0x20] sm:$0xff]
        %v230 = vld [vmem:[#allocation2 + $0x28] sm:$0xff]
        %v231 = vld [vmem:[#allocation2 + $0x30] sm:$0xff]
        %v232 = vld [vmem:[#allocation2 + $0x38] sm:$0xff]
        %v233 = vld [vmem:[#allocation2 + $0x40] sm:$0xff]
        %v234 = vld [vmem:[#allocation2 + $0x48] sm:$0xff]
        %vm235 = vcmask 326656
        %v237 = vsel %vm235, %v222, 0
        %v240 = vsel %vm235, %v223, 0
        %v243 = vsel %vm235, %v224, 0
        %245 = vmatprep.subr.mxu0 %v226
        %246 = vmatpush1.msra.mxu0 %v225
        %247 = vmatprep.subr.mxu0 %v228
        %248 = vmatpush1.msra.mxu0 %v227
        %249 = vmatprep.subr.mxu0 %v230
        %250 = vmatpush1.msra.mxu0 %v229
        %251 = vmatprep.subr.mxu0 %v232
        %252 = vmatpush1.msra.mxu0 %v231
        %253 = vmatprep.subr.mxu0 %v234
        %254 = vmatpush1.msra.mxu0 %v233
        %255 = vmatprep.subr.mxu0 0.0
        %256 = vmatpush1.msra.mxu0 0.0
        %257 = vmatprep.subr.mxu0 0.0
        %258 = vmatpush1.msra.mxu0 0.0
        %259 = vmatprep.subr.mxu0 0.0
        %260 = vmatpush1.msra.mxu0 0.0
        %261 = vmatprep.subr.mxu0 0.0
        %262 = vmatpush1.msra.mxu0 0.0
        %263 = vmatprep.subr.mxu0 0.0
        %264 = vmatpush1.msra.mxu0 0.0
        %265 = vmatprep.subr.mxu0 0.0
        %266 = vmatpush1.msra.mxu0 0.0
        %267 = vmatprep.subr.mxu0 0.0
        %268 = vmatpush1.msra.mxu0 0.0
        %269 = vmatprep.subr.mxu0 0.0
        %270 = vmatpush1.msra.mxu0 0.0
        %271 = vmatprep.subr.mxu0 0.0
        %272 = vmatpush1.msra.mxu0 0.0
        %273 = vmatprep.subr.mxu0 0.0
        %274 = vmatpush1.msra.mxu0 0.0
        %275 = vmatprep.subr.mxu0 0.0
        %276 = vmatpush1.msra.mxu0 0.0
        %277 = vmatprep.subr.mxu0 0.0
        %278 = vmatpush1.msra.mxu0 0.0
        %279 = vmatprep.subr.mxu0 0.0
        %280 = vmatpush1.msra.mxu0 0.0
        %281 = vmatprep.subr.mxu0 0.0
        %282 = vmatpush1.msra.mxu0 0.0
        %283 = vmatprep.subr.mxu0 0.0
        %284 = vmatpush1.msra.mxu0 0.0
        %285 = vmatprep.subr.mxu0 0.0
        %286 = vmatpush1.msra.mxu0 0.0
        %287 = vmatprep.subr.mxu0 0.0
        %288 = vmatpush1.msra.mxu0 0.0
        %289 = vmatprep.subr.mxu0 0.0
        %290 = vmatpush1.msra.mxu0 0.0
        %291 = vmatprep.subr.mxu0 0.0
        %292 = vmatpush1.msra.mxu0 0.0
        %293 = vmatprep.subr.mxu0 0.0
        %294 = vmatpush1.msra.mxu0 0.0
        %295 = vmatprep.subr.mxu0 0.0
        %296 = vmatpush1.msra.mxu0 0.0
        %297 = vmatprep.subr.mxu0 0.0
        %298 = vmatpush1.msra.mxu0 0.0
        %299 = vmatprep.subr.mxu0 0.0
        %300 = vmatpush1.msra.mxu0 0.0
        %301 = vmatprep.subr.mxu0 0.0
        %302 = vmatpush1.msra.mxu0 0.0
        %303 = vmatprep.subr.mxu0 0.0
        %304 = vmatpush1.msra.mxu0 0.0
        %305 = vmatprep.subr.mxu0 0.0
        %306 = vmatpush1.msra.mxu0 0.0
        %307 = vmatprep.subr.mxu0 0.0
        %308 = vmatpush1.msra.mxu0 0.0
        %309 = vmatprep.mubr.f32.mxu0 0.0
        %310 = vmatmul.mubr.f32.gmra.mrb[0].mxu0 %v237
        %v311 = vpop.f32.mrb[0].mxu0
        %v312 = vadd.f32 0.0, %v311
        %v313 = vpop.f32.mrb[0].mxu0
        %v314 = vadd.f32 0.0, %v313
        %315 = vmatprep.mubr.f32.mxu0 0.0
        %316 = vmatmul.mubr.f32.gmra.mrb[0].mxu0 %v240
        %v317 = vpop.f32.mrb[0].mxu0
        %v318 = vadd.f32 0.0, %v317
        %v319 = vpop.f32.mrb[0].mxu0
        %v320 = vadd.f32 0.0, %v319
        %321 = vmatprep.mubr.f32.mxu0 0.0
        %322 = vmatmul.mubr.f32.gmra.mrb[0].mxu0 %v243
        %v323 = vpop.f32.mrb[0].mxu0
        %v324 = vadd.f32 0.0, %v323
        %v325 = vpop.f32.mrb[0].mxu0
        %v326 = vadd.f32 0.0, %v325
        %327 = vdwg.mxu0
        %v328 = vadd.f32 %v312, %v314
        %329 = vadd.xlane.f32.xlu0 %v328
        %v330 = vpop.xlane.xlu0 %329
        %v331 = vadd.f32 %v318, %v320
        %332 = vadd.xlane.f32.xlu0 %v331
        %v333 = vpop.xlane.xlu0 %332
        %v334 = vadd.f32 %v324, %v326
        %335 = vadd.xlane.f32.xlu0 %v334
        %v336 = vpop.xlane.xlu0 %335
        %v337 = vmul.f32 %v330, 0.00390625
        %v338 = vmul.f32 %v333, 0.00390625
        %v339 = vmul.f32 %v336, 0.00390625
        %v340 = vmul.f32 %v312, %v312
        %v341 = vmul.f32 %v314, %v314
        %v342 = vmul.f32 %v318, %v318
        %v343 = vmul.f32 %v320, %v320
        %v344 = vmul.f32 %v324, %v324
        %v345 = vmul.f32 %v326, %v326
        %v346 = vadd.f32 %v340, %v341
        %347 = vadd.xlane.f32.xlu0 %v346
        %v348 = vpop.xlane.xlu0 %347
        %v349 = vadd.f32 %v342, %v343
        %350 = vadd.xlane.f32.xlu0 %v349
        %v351 = vpop.xlane.xlu0 %350
        %v352 = vadd.f32 %v344, %v345
        %353 = vadd.xlane.f32.xlu0 %v352
        %v354 = vpop.xlane.xlu0 %353
        %v355 = vmul.f32 %v348, 0.00390625
        %v356 = vmul.f32 %v351, 0.00390625
        %v357 = vmul.f32 %v354, 0.00390625
        %v358 = vmul.f32 %v337, %v337
        %v359 = vmul.f32 %v338, %v338
        %v360 = vmul.f32 %v339, %v339
        %v361 = vsub.f32 %v355, %v358
        %v362 = vsub.f32 %v356, %v359
        %v363 = vsub.f32 %v357, %v360
        %v364 = vmax.f32 %v361, 0.0
        %v365 = vmax.f32 %v362, 0.0
        %v366 = vmax.f32 %v363, 0.0
        %v367 = vadd.f32 %v364, 1e-12
        %v368 = vadd.f32 %v365, 1e-12
        %v369 = vadd.f32 %v366, 1e-12
        %v370 = vrsqrt.pop %v367
        %v371 = vrsqrt.pop %v368
        %v372 = vrsqrt.pop %v369
        %v373 = vld [vmem:[%s2] ss:$2 sm:$0x3]
        %s374 = scalar_lea.vmem %s2, 1
        %v375 = vld [vmem:[%s374] ss:$2 sm:$0x3]
        %v376 = vsub.f32 %v312, %v337
        %v377 = vsub.f32 %v314, %v337
        %v378 = vsub.f32 %v318, %v338
        %v379 = vsub.f32 %v320, %v338
        %v380 = vsub.f32 %v324, %v339
        %v381 = vsub.f32 %v326, %v339
        %v382 = vmul.f32 %v376, %v370
        %v383 = vmul.f32 %v377, %v370
        %v384 = vmul.f32 %v378, %v371
        %v385 = vmul.f32 %v379, %v371
        %v386 = vmul.f32 %v380, %v372
        %v387 = vmul.f32 %v381, %v372
        %v389 = vlaneseq
        %v390 = vshrl.u32 %v389, 7
        %v391 = vsub.s32 0, %v390
        %v392 = vrot.slane %v373, %v391
        %v393 = vlaneseq
        %v394 = vshrl.u32 %v393, 7
        %v395 = vsub.s32 1, %v394
        %v396 = vrot.slane %v373, %v395
        %v399 = vmul.f32 %v382, %v392
        %v400 = vmul.f32 %v383, %v396
        %v401 = vmul.f32 %v384, %v392
        %v402 = vmul.f32 %v385, %v396
        %v403 = vmul.f32 %v386, %v392
        %v404 = vmul.f32 %v387, %v396
        %v406 = vlaneseq
        %v407 = vshrl.u32 %v406, 7
        %v408 = vsub.s32 0, %v407
        %v409 = vrot.slane %v375, %v408
        %v410 = vlaneseq
        %v411 = vshrl.u32 %v410, 7
        %v412 = vsub.s32 1, %v411
        %v413 = vrot.slane %v375, %v412
        %v416 = vadd.f32 %v399, %v409
        %v417 = vadd.f32 %v400, %v413
        %v418 = vadd.f32 %v401, %v409
        %v419 = vadd.f32 %v402, %v413
        %v420 = vadd.f32 %v403, %v409
        %v421 = vadd.f32 %v404, %v413
        %422 = vst [vmem:[%s179] sm:$0xff] %v416
        %423 = vst [vmem:[%s179 + $0x8] sm:$0xff] %v417
        %424 = vst [vmem:[%s179 + $0x10] sm:$0xff] %v418
        %425 = vst [vmem:[%s179 + $0x18] sm:$0xff] %v419
        %426 = vst [vmem:[%s179 + $0x20] sm:$0xff] %v420
        %427 = vst [vmem:[%s179 + $0x28] sm:$0xff] %v421
        %s428 = sand.u32 %s94, 1
        %s429 = scalar_lea.sflag [#allocation4], %s428
        %s430 = sand.u32 %s94, 1
        %s431 = smul.addr %s430, 48
        %s432 = scalar_lea.vmem [#allocation5], %s431
        // Predicated region
        $region37: #{tpu_custom_call.1} parent=31 // pred_check
          %p433 = pneg %p104
        $region38: #{tpu_custom_call.1} parent=31 // pred_check_branch
          %435 = sbr.rel (%p433) target = $region40
        $region39: #{tpu_custom_call.1} parent=31 // pred_region
          %s436 = smul.u32 3, %s18
          %s438 = ssub.s32 768, 768
          %439 = vsyncadd %s429, %s438
          %s440 = smul.addr %s436, 2
          %s441 = smul.addr %s440, 128
          %s442 = scalar_lea.hbm %s3, %s441
          %s443 = sshll.u32 %s432, 4
          %s444 = int_to_ptr.vmem [resolvable:$true] %s443
          %449 = dma.vmem_to_hbm [thread:$0]  %s444, 768, %s442, %s429, 256, 256, 16
        $region40: #{tpu_custom_call.1} parent=31 // pred_fallthru
          _
      $region32: #{tpu_custom_call.1} parent=5 // pred_fallthru
        _
      %p450 = scmp.le.s32.totalorder 2, %s13
      // Predicated region
      $region41: #{tpu_custom_call.1} parent=5 // pred_check
        %p451 = pneg %p450
      $region42: #{tpu_custom_call.1} parent=5 // pred_check_branch
        %453 = sbr.rel (%p451) target = $region44
      $region43: #{tpu_custom_call.1} parent=5 // pred_region
        %s454 = ssub.s32 %s13, 2
        // Predicated region
        $region45: #{tpu_custom_call.1} parent=43 // pred_check
          %p455 = pneg %p110
        $region46: #{tpu_custom_call.1} parent=43 // pred_check_branch
          %457 = sbr.rel (%p455) target = $region48
        $region47: #{tpu_custom_call.1} parent=43 // pred_region
          %s458 = sand.u32 %s95, 1
          %s459 = scalar_lea.sflag [#allocation4], %s458
          %s460 = sand.u32 %s95, 1
          %s461 = smul.addr %s460, 48
          %s462 = scalar_lea.vmem [#allocation5], %s461
          %463 = dma.done %s459, 768
        $region48: #{tpu_custom_call.1} parent=43 // pred_fallthru
          _
      $region44: #{tpu_custom_call.1} parent=5 // pred_fallthru
        _
    $region6: #{tpu_custom_call.1} parent=1 // loop_footer
      %s17 = sadd.s32 1, %s13
    $region7: #{tpu_custom_call.1} parent=1 // loop_footer_branch
      %12 = sbr.rel target = $region3
    $region8: #{tpu_custom_call.1} parent=1 // loop_exit
      _
    %464 = vsyncpa [#allocation3], 1
    %s465 = scalar_lea.sflag [#allocation3], 1
    %466 = vsyncpa %s465, 1
    %467 = vsyncpa [#allocation4], 1
    %s468 = scalar_lea.sflag [#allocation4], 1
    %469 = vsyncpa %s468, 1

</llo_original>
